<compile_context>
chip_gen: v6e
topology: v6e:2x2x1
jax: 0.10.0
libtpu: 0.0.40
codegen_flags: <defaults>
</compile_context>

<pallas_src>
import jax
import jax.numpy as jnp
from jax import lax
from jax.experimental import pallas as pl
from jax.experimental.pallas import tpu as pltpu

_MIB = 1 << 20
_VMEM_BUDGET = 40 * _MIB          # keeps double-buffered blocks v7x-safe (64 MiB phys)


def _round_up(x, m):
    return ((x + m - 1) // m) * m


def _pad_rows(x, n_pad):
    n = x.shape[0]
    if n_pad == n:
        return x
    return jnp.pad(x, ((0, n_pad - n), (0, 0)))


def _vmem_limit(need_bytes):
    # Never lower below the 32 MiB default; raise (bounded) when tiles need it.
    return int(min(max(32 * _MIB, need_bytes + 4 * _MIB), 56 * _MIB))


# ----------------------------------------------------------------------------
# Weight fold (wrapper-side, one-time):  W[d, d'] = eps * sum_{s,r} sv[s] *
#   P1[s, d, r] * P2[s, d', r]   so that   steer(state) = state + state @ W
# ----------------------------------------------------------------------------
def fold_steer_weights(projector1, projector2, steer_values, epsilon):
    S, D, R = projector1.shape
    p1c = jnp.transpose(projector1, (1, 0, 2)).reshape(D, S * R).astype(jnp.float32)
    scale = (float(epsilon) * steer_values.astype(jnp.float32))[:, None, None]
    p2c = jnp.transpose(scale * projector2.astype(jnp.float32),
                        (0, 2, 1)).reshape(S * R, D)
    return jnp.dot(p1c, p2c, preferred_element_type=jnp.float32)       # (D, D)


# ----------------------------------------------------------------------------
# Kernel 1: SteerNet 'multiply' adapter with folded weights
#   out = state + state @ W
# ----------------------------------------------------------------------------
def _steer_adapter_kernel(state_ref, w_ref, out_ref):
    state = state_ref[...].astype(jnp.float32)                               # (TN, D)
    delta = jnp.dot(state, w_ref[...], preferred_element_type=jnp.float32)   # (TN, D)
    out_ref[...] = (state + delta).astype(out_ref.dtype)


def steer_net_forward(state, projector1, projector2, steer_values, epsilon,
                      tile_n=4096):
    """state: (N, D); projector*: (S, D, R); steer_values: (S,)."""
    # TODO(synk): the steer_values.abs().sum()==0 branch of the reference calls
    # self.lm_head, which does not exist on SteerNet; only the non-zero path is
    # implemented.
    N, D = state.shape
    w = fold_steer_weights(projector1, projector2, steer_values, epsilon)

    if N >= tile_n:
        tn = tile_n
    else:
        tn = _round_up(N, 8)

    def need(t):        # 2x in + 2x out blocks (f32) + 2x W
        return (4 * t * D + 2 * D * D) * 4

    while tn > 8 and need(tn) > _VMEM_BUDGET:
        tn = max(8, _round_up(tn // 2, 8))
    n_pad = _round_up(N, tn)
    state_p = _pad_rows(state, n_pad)

    out = pl.pallas_call(
        _steer_adapter_kernel,
        out_shape=jax.ShapeDtypeStruct((n_pad, D), state.dtype),
        grid=(n_pad // tn,),
        in_specs=[
            pl.BlockSpec((tn, D), lambda i: (i, 0)),
            pl.BlockSpec((D, D), lambda i: (0, 0)),
        ],
        out_specs=pl.BlockSpec((tn, D), lambda i: (i, 0)),
        compiler_params=pltpu.CompilerParams(
            dimension_semantics=("parallel",),
            vmem_limit_bytes=_vmem_limit(need(tn))),
    )(state_p, w)
    return out[:N] if n_pad != N else out


# ----------------------------------------------------------------------------
# Kernel 2: pairwise score  gamma = sum(u * i, dim=1)   (Steer_model.forward)
#   Row-sum produced as a rank-1 MXU matmul so the output block is a
#   lane-dense (1, TB) slab (unmasked vst) instead of a (TB, 1) masked store.
# ----------------------------------------------------------------------------
def _score_kernel(u_ref, i_ref, out_ref):
    u = u_ref[...].astype(jnp.float32)
    it = i_ref[...].astype(jnp.float32)
    prod = u * it                                                       # (TB, D)
    ones = jnp.ones((1, prod.shape[1]), jnp.float32)
    s = lax.dot_general(ones, prod, (((1,), (1,)), ((), ())),
                        preferred_element_type=jnp.float32)             # (1, TB)
    out_ref[...] = s.astype(out_ref.dtype)


def score_pairs(users_emb, items_emb, tile_b=4096):
    # TODO(synk): the all_users[users]/all_items[items] row gathers are left as
    # XLA gathers in the wrapper (a scalar-prefetch pl.Element gather would need
    # a per-row grid and defeat the tiling); revisit if batch becomes large.
    B, D = users_emb.shape
    if B >= tile_b:
        tb = tile_b
        while tb > 256 and (4 * tb * D + 2 * tb) * 4 > _VMEM_BUDGET:
            tb //= 2                                    # stays a multiple of 128
    else:
        tb = _round_up(B, 8)
    b_pad = _round_up(B, tb)
    u = _pad_rows(users_emb, b_pad)
    it = _pad_rows(items_emb, b_pad)
    out = pl.pallas_call(
        _score_kernel,
        out_shape=jax.ShapeDtypeStruct((1, b_pad), jnp.float32),
        grid=(b_pad // tb,),
        in_specs=[pl.BlockSpec((tb, D), lambda i: (i, 0)),
                  pl.BlockSpec((tb, D), lambda i: (i, 0))],
        out_specs=pl.BlockSpec((1, tb), lambda i: (0, i)),
        compiler_params=pltpu.CompilerParams(
            dimension_semantics=("parallel",),
            vmem_limit_bytes=_vmem_limit((4 * tb * D + 2 * tb) * 4)),
    )(u, it)
    return out[0, :B]


# ----------------------------------------------------------------------------
# Kernel 3: steered rating  (Steer_model.getUsersRating hot path)
#   rating = sigmoid(U @ (items + items @ W).T) == sigmoid((U + U @ W^T) @ items.T)
#   Steer applied to the (small) user tile in-kernel -> no standalone pass over
#   the item table.  No in-kernel transpose of items (contract dim 1 of both).
# ----------------------------------------------------------------------------
def _rating_steered_kernel(u_ref, it_ref, wt_ref, out_ref):
    u = u_ref[...].astype(jnp.float32)                                        # (TB, D)
    u = u + jnp.dot(u, wt_ref[...], preferred_element_type=jnp.float32)       # steer users
    logits = lax.dot_general(u, it_ref[...].astype(jnp.float32),
                             (((1,), (1,)), ((), ())),
                             preferred_element_type=jnp.float32)              # (TB, TM)
    out_ref[...] = jax.nn.sigmoid(logits).astype(out_ref.dtype)


def rating_matmul_steered(users_emb, items_emb, w, tile_b=512, tile_m=2048):
    """users_emb: (B, D); items_emb: (M, D); w: (D, D) folded steer matrix."""
    B, D = users_emb.shape
    M, _ = items_emb.shape
    wt = jnp.transpose(w).astype(jnp.float32)          # tiny, one-time

    tb = min(tile_b, _round_up(B, 8))
    tm = min(tile_m, _round_up(M, 128))

    def need(b, m):     # 2x out + 2x users + 2x items + 2x W (all f32)
        return (2 * b * m + 2 * b * D + 2 * m * D + 2 * D * D) * 4

    while need(tb, tm) > _VMEM_BUDGET and (tm > 128 or tb > 8):
        if tm > 128 and (tm >= 4 * tb or tb <= 8):
            tm = max(128, tm // 2)
        else:
            tb = max(8, _round_up(tb // 2, 8))

    b_pad = _round_up(B, tb)
    m_pad = _round_up(M, tm)
    u = _pad_rows(users_emb, b_pad)
    it = _pad_rows(items_emb, m_pad)

    out = pl.pallas_call(
        _rating_steered_kernel,
        out_shape=jax.ShapeDtypeStruct((b_pad, m_pad), jnp.float32),
        grid=(b_pad // tb, m_pad // tm),
        in_specs=[pl.BlockSpec((tb, D), lambda i, j: (i, 0)),
                  pl.BlockSpec((tm, D), lambda i, j: (j, 0)),
                  pl.BlockSpec((D, D), lambda i, j: (0, 0))],
        out_specs=pl.BlockSpec((tb, tm), lambda i, j: (i, j)),
        compiler_params=pltpu.CompilerParams(
            dimension_semantics=("parallel", "parallel"),
            vmem_limit_bytes=_vmem_limit(need(tb, tm))),
    )(u, it, wt)
    if b_pad != B or m_pad != M:
        out = out[:B, :M]
    return out


# ----------------------------------------------------------------------------
# Plain-Python "module" mirroring Steer_model (parameter setup + gathers = glue)
# ----------------------------------------------------------------------------
class SteerModelPallas:
    def __init__(self, key, *, num_users, num_items, latent_dim, num_steers,
                 rank, epsilon, init_var, steer_values):
        k1, k2, k3, k4 = jax.random.split(key, 4)
        # rec_model embedding tables (embedding_user.weight / embedding_item.weight)
        self.user_emb = 0.1 * jax.random.normal(k1, (num_users, latent_dim),
                                                jnp.float32)
        self.item_emb = 0.1 * jax.random.normal(k2, (num_items, latent_dim),
                                                jnp.float32)
        # SteerNet 'multiply' adapter parameters: randn(S, D, R) * init_var
        self.projector1 = init_var * jax.random.normal(
            k3, (num_steers, latent_dim, rank), jnp.float32)
        self.projector2 = init_var * jax.random.normal(
            k4, (num_steers, latent_dim, rank), jnp.float32)
        self.steer_values = steer_values.astype(jnp.float32)
        self.epsilon = epsilon

    def computer(self):
        # TODO(synk): rec_model.computer() (LightGCN propagation) is not defined
        # in the reference code; identity propagation over the embedding tables
        # is used here.
        return self.user_emb, self.item_emb

    def forward(self, users, items):
        all_users, all_items = self.computer()
        users_emb = all_users[users]        # gather (glue)
        items_emb = all_items[items]        # gather (glue)
        return score_pairs(users_emb, items_emb)

    def getEmbedding(self, users, high_items, low_items, neg_items,
                     steer_train=True):
        all_users, all_items = self.computer()
        if steer_train:
            all_items = steer_net_forward(all_items, self.projector1,
                                          self.projector2, self.steer_values,
                                          self.epsilon)
        return (all_users[users], all_items[high_items],
                all_items[low_items], all_items[neg_items])

    def getUsersRating(self, users):
        all_users, all_items = self.computer()
        users_emb = all_users[users]
        # Steer fused into the rating kernel on the user side (B << M); the
        # item table is streamed exactly once.
        w = fold_steer_weights(self.projector1, self.projector2,
                               self.steer_values, self.epsilon)
        return rating_matmul_steered(users_emb, all_items, w)


# ----------------------------------------------------------------------------
# Pure-JAX references for correctness checking (match the PyTorch math)
# ----------------------------------------------------------------------------
def _steer_ref(state, p1, p2, sv, eps):
    tmp = jnp.einsum('nd,sdr->nsr', state, p1)
    delta = jnp.einsum('nsr,sdr,s->nd', tmp, p2, sv)
    return state + eps * delta


if __name__ == "__main__":
    key = jax.random.PRNGKey(0)
    num_users, num_items = 32, 64
    latent_dim, rank, num_steers = 32, 4, 2
    epsilon, init_var = 0.1, 0.01
    batch = 8

    steer_values = jnp.array([1.0, -0.5], dtype=jnp.float32)
    model = SteerModelPallas(key, num_users=num_users, num_items=num_items,
                             latent_dim=latent_dim, num_steers=num_steers,
                             rank=rank, epsilon=epsilon, init_var=init_var,
                             steer_values=steer_values)

    ku, ki = jax.random.split(jax.random.PRNGKey(1))
    users = jax.random.randint(ku, (batch,), 0, num_users, dtype=jnp.int32)
    items = jax.random.randint(ki, (batch,), 0, num_items, dtype=jnp.int32)

    # --- Steer_model.forward ---
    gamma = jax.block_until_ready(model.forward(users, items))
    gamma_ref = jnp.sum(model.user_emb[users] * model.item_emb[items], axis=1)
    assert gamma.shape == (batch,)
    assert jnp.allclose(gamma, gamma_ref, atol=1e-5, rtol=1e-5)

    # --- SteerNet.forward ('multiply' adapter), standalone kernel ---
    steered = jax.block_until_ready(
        steer_net_forward(model.item_emb, model.projector1, model.projector2,
                          model.steer_values, model.epsilon))
    steered_ref = _steer_ref(model.item_emb, model.projector1,
                             model.projector2, model.steer_values, epsilon)
    assert steered.shape == (num_items, latent_dim)
    assert jnp.allclose(steered, steered_ref, atol=1e-5, rtol=1e-5)

    # --- Steer_model.getUsersRating (steer fused on the user side) ---
    ratings = jax.block_until_ready(model.getUsersRating(users))
    ratings_ref = jax.nn.sigmoid(model.user_emb[users] @ steered_ref.T)
    assert ratings.shape == (batch, num_items)
    assert jnp.allclose(ratings, ratings_ref, atol=1e-5, rtol=1e-5)

    print("KERNEL_OK")
</pallas_src>

<mosaic_0001>
module attributes {stable_mosaic.version = 11 : i64} {
  func.func @_score_kernel(%arg0: i32, %arg1: memref<8x32xf32, #tpu.memory_space<vmem>>, %arg2: memref<8x32xf32, #tpu.memory_space<vmem>>, %arg3: memref<1x8xf32, #tpu.memory_space<vmem>>) attributes {dimension_semantics = [#tpu.dimension_semantics<parallel>], iteration_bounds = array<i64: 1>, scalar_prefetch = 0 : i64, scratch_operands = 0 : i64, tpu.core_type = #tpu.core_type<tc>, window_params = [{transform_indices = @transform_0, window_bounds = array<i64: 8, 32>}, {transform_indices = @transform_1, window_bounds = array<i64: 8, 32>}, {transform_indices = @transform_2, window_bounds = array<i64: 1, 8>}]} {
    %c0 = arith.constant 0 : index
    %c0_0 = arith.constant 0 : index
    %0 = vector.load %arg1[%c0, %c0_0] : memref<8x32xf32, #tpu.memory_space<vmem>>, vector<8x32xf32>
    %c0_1 = arith.constant 0 : index
    %c0_2 = arith.constant 0 : index
    %1 = vector.load %arg2[%c0_1, %c0_2] : memref<8x32xf32, #tpu.memory_space<vmem>>, vector<8x32xf32>
    %2 = arith.mulf %0, %1 : vector<8x32xf32>
    %cst = arith.constant 1.000000e+00 : f32
    %3 = vector.broadcast %cst : f32 to vector<1x32xf32>
    %cst_3 = arith.constant dense<0.000000e+00> : vector<1x8xf32>
    %4 = tpu.matmul %3, %2, %cst_3 {dimension_numbers = #tpu.dot_dimension_numbers<[1], [1], [0], [0], [0, 0, 1, 0], [], []>} : vector<1x32xf32>, vector<8x32xf32>, vector<1x8xf32> -> vector<1x8xf32>
    %c0_4 = arith.constant 0 : index
    %c0_5 = arith.constant 0 : index
    %5 = vector.load %arg3[%c0_4, %c0_5] : memref<1x8xf32, #tpu.memory_space<vmem>>, vector<1x8xf32>
    tpu.vector_store %arg3[%c0_4, %c0_5], %4 {strides = array<i32>} : memref<1x8xf32, #tpu.memory_space<vmem>>, vector<1x8xf32>,
    return
  }
  func.func @transform_0(%arg0: i32) -> (i32, i32) {
    %c0_i32 = arith.constant 0 : i32
    %c0_i32_0 = arith.constant 0 : i32
    return %arg0, %c0_i32 : i32, i32
  }
  func.func @transform_1(%arg0: i32) -> (i32, i32) {
    %c0_i32 = arith.constant 0 : i32
    %c0_i32_0 = arith.constant 0 : i32
    return %arg0, %c0_i32 : i32, i32
  }
  func.func @transform_2(%arg0: i32) -> (i32, i32) {
    %c0_i32 = arith.constant 0 : i32
    %c0_i32_0 = arith.constant 0 : i32
    return %c0_i32, %arg0 : i32, i32
  }
}

</mosaic_0001>

<llo_original>
// kernel: tpu_custom_call.1
$region0: #{tpu_custom_call.1}
  #allocation0 [shape = 'u32[]', space=smem, size = 0x4, offset = 0x4, fixed_abs, tag = 'smem constant byte address 0x4 - core index']
  #allocation1 [shape = 'u32[144,128]{1,0:T(1,128)}', space=vmem, size = 0x12000, scoped, tag = 'internal scratch']
  %s0 = inlined_call_operand.hbm [shape: f32[8,32], index: 0, kind: input, shape index: {}]
  %s1 = inlined_call_operand.hbm [shape: f32[8,32], index: 1, kind: input, shape index: {}]
  %s2 = inlined_call_operand.hbm [shape: f32[1,8], index: 2, kind: output, shape index: {}]
  %s3 = sld [smem:[#allocation0]]
  $region26: #{tpu_custom_call.1} parent=0
    _
  %s5 = ssub.s32 1, %s3
  %s6 = scalar_select 0, %s5, %s3
  $region1: #{tpu_custom_call.1} parent=0
    #allocation2 [shape = 'u8[4096]{0}', space=vmem, size = 0x1000, scoped, tag = 'input window, operand 0, single buffered']
    #allocation3 [shape = 's32[1]{0}', space=sflag, size = 0x4, scoped, tag = 'scoped memory for tpu_custom_call.1']
    #allocation4 [shape = 's32[1]{0}', space=sflag, size = 0x4, scoped, tag = 'scoped memory for tpu_custom_call.1']
    #allocation5 [shape = 'u8[4096]{0}', space=vmem, size = 0x1000, scoped, tag = 'input window, operand 1, single buffered']
    #allocation6 [shape = 's32[1]{0}', space=sflag, size = 0x4, scoped, tag = 'scoped memory for tpu_custom_call.1']
    #allocation7 [shape = 'u8[512]{0}', space=vmem, size = 0x400, scoped, tag = 'output window, operand 0, single buffered']
    %7 = vsyncpa [#allocation3], 0
    %8 = vsyncpa [#allocation6], 0
    %9 = vsyncpa [#allocation4], 0
    // Predicated region
    $region2: #{tpu_custom_call.1} parent=1 // pred_check
      _
    $region3: #{tpu_custom_call.1} parent=1 // pred_check_branch
      %11 = sbr.rel (0) target = $region5
    $region4: #{tpu_custom_call.1} parent=1 // pred_region
      %s13 = ssub.s32 128, 128
      %14 = vsyncadd [#allocation3], %s13
      %s16 = sshll.u32 [#allocation2], 4
      %s17 = int_to_ptr.vmem [resolvable:$true] %s16
      %19 = dma.hbm_to_vmem [thread:$0]  %s0, 128, %s17, [#allocation3]
    $region5: #{tpu_custom_call.1} parent=1 // pred_fallthru
      _
    // Predicated region
    $region6: #{tpu_custom_call.1} parent=1 // pred_check
      _
    $region7: #{tpu_custom_call.1} parent=1 // pred_check_branch
      %21 = sbr.rel (0) target = $region9
    $region8: #{tpu_custom_call.1} parent=1 // pred_region
      %s23 = ssub.s32 128, 128
      %24 = vsyncadd [#allocation6], %s23
      %s26 = sshll.u32 [#allocation5], 4
      %s27 = int_to_ptr.vmem [resolvable:$true] %s26
      %29 = dma.hbm_to_vmem [thread:$0]  %s1, 128, %s27, [#allocation6]
    $region9: #{tpu_custom_call.1} parent=1 // pred_fallthru
      _
    // Predicated region
    $region10: #{tpu_custom_call.1} parent=1 // pred_check
      _
    $region11: #{tpu_custom_call.1} parent=1 // pred_check_branch
      %31 = sbr.rel (0) target = $region13
    $region12: #{tpu_custom_call.1} parent=1 // pred_region
      %32 = dma.done [#allocation3], 128
    $region13: #{tpu_custom_call.1} parent=1 // pred_fallthru
      _
    // Predicated region
    $region14: #{tpu_custom_call.1} parent=1 // pred_check
      _
    $region15: #{tpu_custom_call.1} parent=1 // pred_check_branch
      %34 = sbr.rel (0) target = $region17
    $region16: #{tpu_custom_call.1} parent=1 // pred_region
      %35 = dma.done [#allocation6], 128
    $region17: #{tpu_custom_call.1} parent=1 // pred_fallthru
      _
    %v36 = vld [vmem:[#allocation2] sm:$0xff]
    %v37 = vld [vmem:[#allocation5] sm:$0xff]
    %v38 = vmul.f32 %v36, %v37
    %vm39 = vcmask 261120
    %v41 = vsel %vm39, 1.0, 0
    %v44 = vsel %vm39, %v38, 0
    %46 = vmatprep.subr.mxu0 0.0
    %47 = vmatpush1.xpose.msra.mxu0 0.0
    %48 = vmatprep.subr.mxu0 0.0
    %49 = vmatpush1.xpose.msra.mxu0 0.0
    %50 = vmatprep.subr.mxu0 0.0
    %51 = vmatpush1.xpose.msra.mxu0 0.0
    %52 = vmatprep.subr.mxu0 0.0
    %53 = vmatpush1.xpose.msra.mxu0 0.0
    %54 = vmatprep.subr.mxu0 0.0
    %55 = vmatpush1.xpose.msra.mxu0 0.0
    %56 = vmatprep.subr.mxu0 0.0
    %57 = vmatpush1.xpose.msra.mxu0 0.0
    %58 = vmatprep.subr.mxu0 0.0
    %59 = vmatpush1.xpose.msra.mxu0 0.0
    %60 = vmatprep.subr.mxu0 0.0
    %61 = vmatpush1.xpose.msra.mxu0 0.0
    %62 = vmatprep.subr.mxu0 0.0
    %63 = vmatpush1.xpose.msra.mxu0 0.0
    %64 = vmatprep.subr.mxu0 0.0
    %65 = vmatpush1.xpose.msra.mxu0 0.0
    %66 = vmatprep.subr.mxu0 0.0
    %67 = vmatpush1.xpose.msra.mxu0 0.0
    %68 = vmatprep.subr.mxu0 0.0
    %69 = vmatpush1.xpose.msra.mxu0 0.0
    %70 = vmatprep.subr.mxu0 0.0
    %71 = vmatpush1.xpose.msra.mxu0 0.0
    %72 = vmatprep.subr.mxu0 0.0
    %73 = vmatpush1.xpose.msra.mxu0 0.0
    %74 = vmatprep.subr.mxu0 0.0
    %75 = vmatpush1.xpose.msra.mxu0 0.0
    %76 = vmatprep.subr.mxu0 0.0
    %77 = vmatpush1.xpose.msra.mxu0 %v44
    %78 = vmatprep.subr.mxu0 0.0
    %79 = vmatpush2.xpose.msra.mxu0 0.0
    %80 = vmatprep.subr.mxu0 0.0
    %81 = vmatpush2.xpose.msra.mxu0 0.0
    %82 = vmatprep.subr.mxu0 0.0
    %83 = vmatpush2.xpose.msra.mxu0 0.0
    %84 = vmatprep.subr.mxu0 0.0
    %85 = vmatpush2.xpose.msra.mxu0 0.0
    %86 = vmatprep.subr.mxu0 0.0
    %87 = vmatpush2.xpose.msra.mxu0 0.0
    %88 = vmatprep.subr.mxu0 0.0
    %89 = vmatpush2.xpose.msra.mxu0 0.0
    %90 = vmatprep.subr.mxu0 0.0
    %91 = vmatpush2.xpose.msra.mxu0 0.0
    %92 = vmatprep.subr.mxu0 0.0
    %93 = vmatpush2.xpose.msra.mxu0 0.0
    %94 = vmatprep.subr.mxu0 0.0
    %95 = vmatpush2.xpose.msra.mxu0 0.0
    %96 = vmatprep.subr.mxu0 0.0
    %97 = vmatpush2.xpose.msra.mxu0 0.0
    %98 = vmatprep.subr.mxu0 0.0
    %99 = vmatpush2.xpose.msra.mxu0 0.0
    %100 = vmatprep.subr.mxu0 0.0
    %101 = vmatpush2.xpose.msra.mxu0 0.0
    %102 = vmatprep.subr.mxu0 0.0
    %103 = vmatpush2.xpose.msra.mxu0 0.0
    %104 = vmatprep.subr.mxu0 0.0
    %105 = vmatpush2.xpose.msra.mxu0 0.0
    %106 = vmatprep.subr.mxu0 0.0
    %107 = vmatpush2.xpose.msra.mxu0 0.0
    %108 = vmatprep.subr.mxu0 0.0
    %109 = vmatpush2.xpose.msra.mxu0 0.0
    %110 = vmatprep.mubr.f32.mxu0 0.0
    %111 = vmatmul.mubr.f32.gmra.mxu0 %v41
    %v112 = vpop.f32.mrf.mxu0
    %v113 = vadd.f32 0.0, %v112
    %v114 = vpop.f32.mrf.mxu0
    %115 = vdwg.mxu0
    %vm116 = vcmask 57344
    %117 = vst.msk [vmem:[#allocation7] sm:$0x1] %vm116, %v113
    // Predicated region
    $region18: #{tpu_custom_call.1} parent=1 // pred_check
      _
    $region19: #{tpu_custom_call.1} parent=1 // pred_check_branch
      %119 = sbr.rel (0) target = $region21
    $region20: #{tpu_custom_call.1} parent=1 // pred_region
      %s121 = ssub.s32 16, 16
      %122 = vsyncadd [#allocation4], %s121
      %s124 = sshll.u32 [#allocation7], 4
      %s125 = int_to_ptr.vmem [resolvable:$true] %s124
      %127 = dma.vmem_to_hbm [thread:$0]  %s125, 16, %s2, [#allocation4]
    $region21: #{tpu_custom_call.1} parent=1 // pred_fallthru
      _
    // Predicated region
    $region22: #{tpu_custom_call.1} parent=1 // pred_check
      _
    $region23: #{tpu_custom_call.1} parent=1 // pred_check_branch
      %129 = sbr.rel (0) target = $region25
    $region24: #{tpu_custom_call.1} parent=1 // pred_region
      %130 = dma.done [#allocation4], 16
    $region25: #{tpu_custom_call.1} parent=1 // pred_fallthru
      _
    %131 = vsyncpa [#allocation3], 1
    %132 = vsyncpa [#allocation6], 1
    %133 = vsyncpa [#allocation4], 1

</llo_original>
